<compile_context>
chip_gen: v6e
topology: v6e:2x2x1
jax: 0.10.0
libtpu: 0.0.40
codegen_flags: <defaults>
</compile_context>

<pallas_src>
import jax
import jax.numpy as jnp
from jax.experimental import pallas as pl
from jax.experimental.pallas import tpu as pltpu


def _attn_pool_kernel(x_ref, w_ref, b_ref, scores_ref, pooled_ref):
    # x_ref:      (BB, C, TT, N) VMEM tile = x[b0:b0+BB, :, t0:t0+TT, :]
    # w_ref:      (C, 1, 1)      VMEM      = attention_fc weight (per channel)
    # b_ref:      (1,)           SMEM      = attention_fc bias
    # scores_ref: (BB, TT, N)    pre-sigmoid attention scores (lane-dense, N wide)
    # pooled_ref: (BB, TT, C)    attention-pooled features, T-major layout
    x = x_ref[...].astype(jnp.float32)               # (BB, C, TT, N)
    w = w_ref[...]                                   # (C, 1, 1)
    bias = b_ref[0]                                  # scalar (SMEM)

    # scores[b,t,n] = sum_c x[b,c,t,n] * w[c] + bias   (VPU mul + major-axis reduce)
    scores = jnp.sum(x * w[None, :, :, :], axis=1) + bias       # (BB, TT, N)
    sig = jax.nn.sigmoid(scores)                                # (BB, TT, N)

    # pooled[b,c,t] = sum_n x[b,c,t,n] * sig[b,t,n]    (VPU mul + XLU lane reduce)
    pooled = jnp.sum(x * sig[:, None, :, :], axis=-1)           # (BB, C, TT)

    scores_ref[...] = scores.astype(scores_ref.dtype)
    # Emit pooled T-major: small (C,TT)->(TT,C) XLU transpose per tile; keeps TT
    # in the sublane dim (only needs %8 / full-T tiling) and makes `hidden` a
    # free reshape in the wrapper.
    pooled_ref[...] = jnp.transpose(pooled, (0, 2, 1)).astype(pooled_ref.dtype)


def _vmem_capacity_bytes():
    try:
        return int(pltpu.get_tpu_info().vmem_capacity_bytes)
    except Exception:
        return 64 << 20          # conservative: v7x has the smallest VMEM


def _choose_blocks(B, C, T, N, itemsize, target_bytes):
    """Pick (BB, TT) so the x block (BB, C, TT, N) reaches the multi-MiB DMA
    sweet spot while every block stays TPU-tileable:
      - TT == T  or  TT % 8 == 0   (N and C are always full extent)
    and the grid keeps >= 2 steps when possible (both v7x TCs busy)."""
    row_bytes = C * N * itemsize                    # one t-slice of one batch
    if T * row_bytes <= target_bytes or T <= 8:
        tt = T
    else:
        tt = max(8, min((target_bytes // row_bytes) // 8 * 8, (T // 8) * 8))
    n_tb = pl.cdiv(T, tt)

    bb = 1
    if tt == T and B > 1:
        budget_bb = max(1, int(target_bytes // max(1, T * row_bytes)))
        for cand in range(min(B, budget_bb), 0, -1):
            if B % cand == 0 and (B // cand) * n_tb >= 2:
                bb = cand
                break
    return bb, tt, n_tb


@jax.jit
def simple_attention_pool_multiimg_sig(x, weight, bias):
    """x: (B, C, T, W, H); weight: (1, C); bias: (1,).

    Returns dict with:
      image_attention:    (B, T, W*H)   (pre-sigmoid scores)
      multi_image_hidden: (B, C, T)
      hidden:             (B, T*C)
    """
    B, C, T, W, H = x.shape
    N = W * H
    itemsize = x.dtype.itemsize

    # Free metadata reshape — no HBM transpose / copy of x.
    x_bctn = x.reshape(B, C, T, N)
    w3 = weight.reshape(C, 1, 1).astype(jnp.float32)
    b1 = bias.reshape(1).astype(jnp.float32)

    # Generation-aware block target / VMEM cap.
    vmem_phys = _vmem_capacity_bytes()
    if vmem_phys >= (96 << 20):              # v5e / v6e: 128 MiB physical VMEM
        target_bytes, vmem_cap = 12 << 20, 96 << 20
    else:                                    # v7x: 64 MiB physical VMEM
        target_bytes, vmem_cap = 5 << 20, 40 << 20

    BB, TT, n_tb = _choose_blocks(B, C, T, N, itemsize, target_bytes)
    n_bb = B // BB

    # VMEM budget: double-buffered blocks + the two (BB,C,TT,N)-sized f32
    # elementwise temporaries (x*w, x*sig) + padded weight tiles + headroom.
    x_blk = BB * C * TT * N * itemsize
    scr_blk = BB * TT * N * 4
    pool_blk = BB * TT * C * 4
    tmp_blk = 2 * BB * C * TT * N * 4
    w_pad = 2 * C * 8 * 128 * 4
    vmem_bytes = 2 * (x_blk + scr_blk + pool_blk) + tmp_blk + w_pad + (2 << 20)
    vmem_bytes = int(min(max(vmem_bytes, 16 << 20), vmem_cap))

    cost = pl.CostEstimate(
        flops=4 * B * C * T * N,                 # scores + pooled multiply/adds
        transcendentals=B * T * N,               # sigmoid
        bytes_accessed=B * C * T * N * itemsize + B * T * N * 4 + B * T * C * 4,
    )

    scores, pooled_t = pl.pallas_call(
        _attn_pool_kernel,
        out_shape=(
            jax.ShapeDtypeStruct((B, T, N), jnp.float32),    # image_attention
            jax.ShapeDtypeStruct((B, T, C), jnp.float32),    # pooled, T-major
        ),
        grid_spec=pltpu.PrefetchScalarGridSpec(
            num_scalar_prefetch=0,
            grid=(n_bb, n_tb),
            in_specs=[
                pl.BlockSpec((BB, C, TT, N), lambda b, t: (b, 0, t, 0)),
                pl.BlockSpec((C, 1, 1), lambda b, t: (0, 0, 0)),
                pl.BlockSpec(memory_space=pltpu.MemorySpace.SMEM),
            ],
            out_specs=[
                pl.BlockSpec((BB, TT, N), lambda b, t: (b, t, 0)),
                pl.BlockSpec((BB, TT, C), lambda b, t: (b, t, 0)),
            ],
        ),
        compiler_params=pltpu.CompilerParams(
            dimension_semantics=("parallel", "parallel"),
            vmem_limit_bytes=vmem_bytes,
        ),
        cost_estimate=cost,
    )(x_bctn, w3, b1)

    out = {}
    out["image_attention"] = scores                                    # (B, T, N)
    out["multi_image_hidden"] = jnp.transpose(pooled_t, (0, 2, 1))     # (B, C, T) tiny
    out["hidden"] = pooled_t.reshape(B, T * C)                         # free reshape
    return out


def _reference(x, weight, bias):
    """Pure-JAX reference mirroring the PyTorch forward."""
    B, C, T, W, H = x.shape
    N = W * H
    xr = x.reshape(B, C, T, N).astype(jnp.float32)
    w = weight.reshape(C).astype(jnp.float32)
    b = bias.reshape(()).astype(jnp.float32)
    scores = jnp.einsum("bctn,c->btn", xr, w) + b
    sig = jax.nn.sigmoid(scores)
    pooled = jnp.einsum("bctn,btn->bct", xr, sig)
    return {
        "image_attention": scores,
        "multi_image_hidden": pooled,
        "hidden": jnp.transpose(pooled, (0, 2, 1)).reshape(B, T * C),
    }


if __name__ == "__main__":
    B, C, T, W, H = 2, 8, 4, 16, 16

    key = jax.random.PRNGKey(0)
    kx, kw, kb = jax.random.split(key, 3)
    x = jax.random.normal(kx, (B, C, T, W, H), dtype=jnp.float32)
    # Deterministic "Linear(C, 1)" parameters (synthetic init, not a checkpoint).
    bound = 1.0 / jnp.sqrt(jnp.float32(C))
    weight = jax.random.uniform(kw, (1, C), jnp.float32, -bound, bound)
    bias = jax.random.uniform(kb, (1,), jnp.float32, -bound, bound)

    out = simple_attention_pool_multiimg_sig(x, weight, bias)
    out = jax.tree_util.tree_map(jax.block_until_ready, out)

    ref = _reference(x, weight, bias)
    for k in ("image_attention", "multi_image_hidden", "hidden"):
        assert out[k].shape == ref[k].shape, (k, out[k].shape, ref[k].shape)
        assert jnp.allclose(out[k], ref[k], atol=1e-4, rtol=1e-4), k

    print("KERNEL_OK")
</pallas_src>

<mosaic_0001>
module attributes {stable_mosaic.version = 11 : i64} {
  func.func @_attn_pool_kernel(%arg0: i32, %arg1: i32, %arg2: memref<1x8x4x256xf32, #tpu.memory_space<vmem>>, %arg3: memref<8x1x1xf32, #tpu.memory_space<vmem>>, %arg4: memref<1xf32, #tpu.memory_space<smem>>, %arg5: memref<1x4x256xf32, #tpu.memory_space<vmem>>, %arg6: memref<1x4x8xf32, #tpu.memory_space<vmem>>) attributes {dimension_semantics = [#tpu.dimension_semantics<parallel>, #tpu.dimension_semantics<parallel>], iteration_bounds = array<i64: 2, 1>, scalar_prefetch = 0 : i64, scratch_operands = 0 : i64, tpu.core_type = #tpu.core_type<tc>, window_params = [{transform_indices = @transform_0, window_bounds = array<i64: 1, 8, 4, 256>}, {pipeline_mode = #tpu.pipeline_mode<synchronous>, transform_indices = @transform_1, window_bounds = array<i64: 8, 1, 1>}, {transform_indices = @transform_2, window_bounds = array<i64: 1>}, {transform_indices = @transform_3, window_bounds = array<i64: 1, 4, 256>}, {transform_indices = @transform_4, window_bounds = array<i64: 1, 4, 8>}]} {
    %c0 = arith.constant 0 : index
    %c0_0 = arith.constant 0 : index
    %c0_1 = arith.constant 0 : index
    %c0_2 = arith.constant 0 : index
    %0 = vector.load %arg2[%c0, %c0_0, %c0_1, %c0_2] : memref<1x8x4x256xf32, #tpu.memory_space<vmem>>, vector<1x8x4x256xf32>
    %c0_3 = arith.constant 0 : index
    %c0_4 = arith.constant 0 : index
    %c0_5 = arith.constant 0 : index
    %1 = vector.load %arg3[%c0_3, %c0_4, %c0_5] : memref<8x1x1xf32, #tpu.memory_space<vmem>>, vector<8x1x1xf32>
    %c0_6 = arith.constant 0 : index
    %2 = memref.load %arg4[%c0_6] : memref<1xf32, #tpu.memory_space<smem>>
    %3 = vector.shape_cast %1 : vector<8x1x1xf32> to vector<1x8x1x1xf32>
    %4 = vector.broadcast %3 : vector<1x8x1x1xf32> to vector<1x8x4x256xf32>
    %5 = arith.mulf %0, %4 : vector<1x8x4x256xf32>
    %cst = arith.constant dense<0.000000e+00> : vector<1x4x256xf32>
    %6 = vector.multi_reduction <add>, %5, %cst [1] : vector<1x8x4x256xf32> to vector<1x4x256xf32>
    %7 = vector.broadcast %2 : f32 to vector<1x4x256xf32>
    %8 = arith.addf %6, %7 : vector<1x4x256xf32>
    %9 = arith.negf %8 : vector<1x4x256xf32>
    %10 = math.exp %9 : vector<1x4x256xf32>
    %cst_7 = arith.constant 1.000000e+00 : f32
    %11 = vector.broadcast %cst_7 : f32 to vector<1x4x256xf32>
    %12 = arith.addf %11, %10 : vector<1x4x256xf32>
    %13 = arith.divf %11, %12 : vector<1x4x256xf32>
    %14 = vector.shape_cast %13 : vector<1x4x256xf32> to vector<1x1x4x256xf32>
    %15 = vector.broadcast %14 : vector<1x1x4x256xf32> to vector<1x8x4x256xf32>
    %16 = arith.mulf %0, %15 : vector<1x8x4x256xf32>
    %cst_8 = arith.constant dense<0.000000e+00> : vector<1x8x4xf32>
    %17 = vector.multi_reduction <add>, %16, %cst_8 [3] : vector<1x8x4x256xf32> to vector<1x8x4xf32>
    %c0_9 = arith.constant 0 : index
    %c0_10 = arith.constant 0 : index
    %c0_11 = arith.constant 0 : index
    %18 = vector.load %arg5[%c0_9, %c0_10, %c0_11] : memref<1x4x256xf32, #tpu.memory_space<vmem>>, vector<1x4x256xf32>
    tpu.vector_store %arg5[%c0_9, %c0_10, %c0_11], %8 {strides = array<i32>} : memref<1x4x256xf32, #tpu.memory_space<vmem>>, vector<1x4x256xf32>,
    %19 = tpu.transpose %17, [0, 2, 1] : vector<1x8x4xf32> -> vector<1x4x8xf32>
    %c0_12 = arith.constant 0 : index
    %c0_13 = arith.constant 0 : index
    %c0_14 = arith.constant 0 : index
    %20 = vector.load %arg6[%c0_12, %c0_13, %c0_14] : memref<1x4x8xf32, #tpu.memory_space<vmem>>, vector<1x4x8xf32>
    tpu.vector_store %arg6[%c0_12, %c0_13, %c0_14], %19 {strides = array<i32>} : memref<1x4x8xf32, #tpu.memory_space<vmem>>, vector<1x4x8xf32>,
    return
  }
  func.func @transform_0(%arg0: i32, %arg1: i32) -> (i32, i32, i32, i32) {
    %c0_i32 = arith.constant 0 : i32
    %c0_i32_0 = arith.constant 0 : i32
    %c0_i32_1 = arith.constant 0 : i32
    return %arg0, %c0_i32, %arg1, %c0_i32_0 : i32, i32, i32, i32
  }
  func.func @transform_1(%arg0: i32, %arg1: i32) -> (i32, i32, i32) {
    %c0_i32 = arith.constant 0 : i32
    %c0_i32_0 = arith.constant 0 : i32
    %c0_i32_1 = arith.constant 0 : i32
    %c0_i32_2 = arith.constant 0 : i32
    return %c0_i32, %c0_i32_0, %c0_i32_1 : i32, i32, i32
  }
  func.func @transform_2(%arg0: i32, %arg1: i32) -> i32 {
    %c0_i32 = arith.constant 0 : i32
    %c0_i32_0 = arith.constant 0 : i32
    return %c0_i32 : i32
  }
  func.func @transform_3(%arg0: i32, %arg1: i32) -> (i32, i32, i32) {
    %c0_i32 = arith.constant 0 : i32
    %c0_i32_0 = arith.constant 0 : i32
    return %arg0, %arg1, %c0_i32 : i32, i32, i32
  }
  func.func @transform_4(%arg0: i32, %arg1: i32) -> (i32, i32, i32) {
    %c0_i32 = arith.constant 0 : i32
    %c0_i32_0 = arith.constant 0 : i32
    return %arg0, %arg1, %c0_i32 : i32, i32, i32
  }
}

</mosaic_0001>

<llo_original>
// kernel: simple_attention_pool_multiimg_sig.1
$region0: #{simple_attention_pool_multiimg_sig.1}
  #allocation0 [shape = 'u32[]', space=smem, size = 0x4, offset = 0x4, fixed_abs, tag = 'smem constant byte address 0x4 - core index']
  #allocation1 [shape = 'u32[144,128]{1,0:T(1,128)}', space=vmem, size = 0x12000, scoped, tag = 'internal scratch']
  #allocation2 [shape = 'f32[1]{0:T(128)S(6)}', space=smem, size = 0x200, scoped, tag = 'scoped memory for simple_attention_pool_multiimg_sig.1']
  %s0 = inlined_call_operand.vmem [shape: f32[2,8,4,256], index: 0, kind: input, shape index: {}]
  %s1 = inlined_call_operand.vmem [shape: f32[8,1,1], index: 1, kind: input, shape index: {}]
  %s2 = inlined_call_operand.<no memory space> [shape: f32[1], index: 2, kind: input, shape index: {}]
  %s3 = inlined_call_operand.hbm [shape: f32[2,4,256], index: 3, kind: output, shape index: {0}]
  %s4 = inlined_call_operand.vmem [shape: f32[2,4,8], index: 4, kind: output, shape index: {1}]
  %5 = xla_tuple %s3, %s4
  %s6 = sld [smem:[#allocation0]]
  $region53: #{simple_attention_pool_multiimg_sig.1} parent=0
    _
  %s8 = ssub.s32 1, %s6
  %s9 = scalar_select 0, %s8, %s6
  %10 = sst [smem:[#allocation2]] %s2
  $region1: #{simple_attention_pool_multiimg_sig.1} parent=0
    #allocation3 [shape = 'u8[8192]{0}', space=vmem, size = 0x2000, scoped, tag = 'output window, operand 0']
    #allocation4 [shape = 's32[2]{0}', space=sflag, size = 0x8, scoped, tag = 'scoped memory for simple_attention_pool_multiimg_sig.1']
    %11 = vsyncpa [#allocation4], 0
    %s12 = scalar_lea.sflag [#allocation4], 1
    %13 = vsyncpa %s12, 0
    loop: start=0, step=1, limit=4
    $region2: #{simple_attention_pool_multiimg_sig.1} parent=1 // loop_pre_header
      _
    $region3: #{simple_attention_pool_multiimg_sig.1} parent=1 // loop_header
      %s15 = sphi 0, %s19
      %p16 = scmp.ge.s32.totalorder %s15, 4
      %s22 = sphi 0, %s34
      %s23 = sphi 0, %s30
      %s24 = sphi 0, %s22
      %s25 = sphi 0, %s23
      %s26 = sphi 0, %s24
      %s27 = sphi 0, %s25
      %s39 = sphi 0, %s41
      %s42 = sphi 0, %s39
      %s43 = sphi 0, %s42
      %s59 = sphi 0, %s43
      %s63 = sphi 0, %s63
      %s65 = sphi 0, %s63
      %s66 = sphi 0, %s65
      %s80 = sphi 0, %s66
      %s84 = sphi 0, %s84
      %s86 = sphi 0, %s84
      %s87 = sphi 0, %s86
      %s101 = sphi 0, %s87
      %s109 = sphi 0, %s111
      %s112 = sphi 0, %s109
      %s113 = sphi 0, %s112
      %s129 = sphi 0, %s113
      %s137 = sphi 0, %s139
      %s140 = sphi 0, %s137
      %s141 = sphi 0, %s140
      %s157 = sphi 0, %s141
    $region4: #{simple_attention_pool_multiimg_sig.1} parent=1 // loop_header_branch
      %18 = sbr.rel (%p16) target = $region8
    $region5: #{simple_attention_pool_multiimg_sig.1} parent=1 // loop_body
      %s20 = ssub.s32 %s15, 1
      %s21 = ssub.s32 %s15, 2
      %s28 = sadd.s32 1, %s23
      %p29 = scmp.ge.s32.totalorder %s28, 1
      %s30 = scalar_select %p29, 0, %s28
      %s31 = sadd.s32 1, %s22
      %s32 = scalar_select %p29, %s31, %s22
      %p33 = scmp.ge.s32.totalorder %s32, 2
      %s34 = scalar_select %p33, 0, %s32
      %s35 = ssub.s32 %s22, %s34
      %s36 = ssub.s32 %s23, %s30
      %s37 = sor.u32 %s35, %s36
      %p38 = scmp.eq.s32.totalorder %s37, 0
      %s40 = sadd.s32 %s39, 1
      %s41 = scalar_select %p38, %s39, %s40
      %p44 = pneg %p38
      %p45 = scmp.eq.s32.totalorder %s15, 1
      %p46 = por %p44, %p45
      %p47 = scmp.ne.s32.totalorder %s39, %s42
      %p48 = scmp.eq.s32.totalorder %s15, 0
      %p49 = por %p47, %p48
      %p50 = scmp.ne.s32.totalorder %s39, %s42
      %p51 = scmp.eq.s32.totalorder %s20, 1
      %p52 = por %p50, %p51
      %p53 = scmp.ne.s32.totalorder %s42, %s43
      %p54 = scmp.eq.s32.totalorder %s20, 0
      %p55 = por %p53, %p54
      %p56 = scmp.ne.s32.totalorder %s42, %s43
      %p57 = scmp.eq.s32.totalorder %s21, 1
      %p58 = por %p56, %p57
      %p60 = scmp.ne.s32.totalorder %s43, %s59
      %p61 = scmp.eq.s32.totalorder %s21, 0
      %p62 = por %p60, %p61
      %s64 = sadd.s32 %s63, 1
      %p67 = scmp.eq.s32.totalorder %s15, 1
      %p68 = scmp.ne.s32.totalorder %s63, %s65
      %p69 = scmp.eq.s32.totalorder %s15, 0
      %p70 = por %p68, %p69
      %p71 = scmp.ne.s32.totalorder %s63, %s65
      %p72 = scmp.eq.s32.totalorder %s20, 1
      %p73 = por %p71, %p72
      %p74 = scmp.ne.s32.totalorder %s65, %s66
      %p75 = scmp.eq.s32.totalorder %s20, 0
      %p76 = por %p74, %p75
      %p77 = scmp.ne.s32.totalorder %s65, %s66
      %p78 = scmp.eq.s32.totalorder %s21, 1
      %p79 = por %p77, %p78
      %p81 = scmp.ne.s32.totalorder %s66, %s80
      %p82 = scmp.eq.s32.totalorder %s21, 0
      %p83 = por %p81, %p82
      %s85 = sadd.s32 %s84, 1
      %p88 = scmp.eq.s32.totalorder %s15, 1
      %p89 = scmp.ne.s32.totalorder %s84, %s86
      %p90 = scmp.eq.s32.totalorder %s15, 0
      %p91 = por %p89, %p90
      %p92 = scmp.ne.s32.totalorder %s84, %s86
      %p93 = scmp.eq.s32.totalorder %s20, 1
      %p94 = por %p92, %p93
      %p95 = scmp.ne.s32.totalorder %s86, %s87
      %p96 = scmp.eq.s32.totalorder %s20, 0
      %p97 = por %p95, %p96
      %p98 = scmp.ne.s32.totalorder %s86, %s87
      %p99 = scmp.eq.s32.totalorder %s21, 1
      %p100 = por %p98, %p99
      %p102 = scmp.ne.s32.totalorder %s87, %s101
      %p103 = scmp.eq.s32.totalorder %s21, 0
      %p104 = por %p102, %p103
      %s105 = ssub.s32 %s22, %s34
      %s106 = ssub.s32 %s23, %s30
      %s107 = sor.u32 %s105, %s106
      %p108 = scmp.eq.s32.totalorder %s107, 0
      %s110 = sadd.s32 %s109, 1
      %s111 = scalar_select %p108, %s109, %s110
      %p114 = pneg %p108
      %p115 = scmp.eq.s32.totalorder %s15, 1
      %p116 = por %p114, %p115
      %p117 = scmp.ne.s32.totalorder %s109, %s112
      %p118 = scmp.eq.s32.totalorder %s15, 0
      %p119 = por %p117, %p118
      %p120 = scmp.ne.s32.totalorder %s109, %s112
      %p121 = scmp.eq.s32.totalorder %s20, 1
      %p122 = por %p120, %p121
      %p123 = scmp.ne.s32.totalorder %s112, %s113
      %p124 = scmp.eq.s32.totalorder %s20, 0
      %p125 = por %p123, %p124
      %p126 = scmp.ne.s32.totalorder %s112, %s113
      %p127 = scmp.eq.s32.totalorder %s21, 1
      %p128 = por %p126, %p127
      %p130 = scmp.ne.s32.totalorder %s113, %s129
      %p131 = scmp.eq.s32.totalorder %s21, 0
      %p132 = por %p130, %p131
      %s133 = ssub.s32 %s22, %s34
      %s134 = ssub.s32 %s23, %s30
      %s135 = sor.u32 %s133, %s134
      %p136 = scmp.eq.s32.totalorder %s135, 0
      %s138 = sadd.s32 %s137, 1
      %s139 = scalar_select %p136, %s137, %s138
      %p142 = pneg %p136
      %p143 = scmp.eq.s32.totalorder %s15, 1
      %p144 = por %p142, %p143
      %p145 = scmp.ne.s32.totalorder %s137, %s140
      %p146 = scmp.eq.s32.totalorder %s15, 0
      %p147 = por %p145, %p146
      %p148 = scmp.ne.s32.totalorder %s137, %s140
      %p149 = scmp.eq.s32.totalorder %s20, 1
      %p150 = por %p148, %p149
      %p151 = scmp.ne.s32.totalorder %s140, %s141
      %p152 = scmp.eq.s32.totalorder %s20, 0
      %p153 = por %p151, %p152
      %p154 = scmp.ne.s32.totalorder %s140, %s141
      %p155 = scmp.eq.s32.totalorder %s21, 1
      %p156 = por %p154, %p155
      %p158 = scmp.ne.s32.totalorder %s141, %s157
      %p159 = scmp.eq.s32.totalorder %s21, 0
      %p160 = por %p158, %p159
      %p161 = scmp.le.s32.totalorder 1, %s15
      %p162 = scmp.lt.s32.totalorder %s15, 3
      %p163 = pnand %p161, %p162
      %p164 = pneg %p163
      // Predicated region
      $region9: #{simple_attention_pool_multiimg_sig.1} parent=5 // pred_check
        _
      $region10: #{simple_attention_pool_multiimg_sig.1} parent=5 // pred_check_branch
        %166 = sbr.rel (%p163) target = $region12
      $region11: #{simple_attention_pool_multiimg_sig.1} parent=5 // pred_region
        %s167 = ssub.s32 %s15, 1
        // Predicated region
        $region13: #{simple_attention_pool_multiimg_sig.1} parent=11 // pred_check
          %p168 = pneg %p76
        $region14: #{simple_attention_pool_multiimg_sig.1} parent=11 // pred_check_branch
          %170 = sbr.rel (%p168) target = $region16
        $region15: #{simple_attention_pool_multiimg_sig.1} parent=11 // pred_region
          _
        $region16: #{simple_attention_pool_multiimg_sig.1} parent=11 // pred_fallthru
          _
        // Predicated region
        $region17: #{simple_attention_pool_multiimg_sig.1} parent=11 // pred_check
          %p171 = pneg %p97
        $region18: #{simple_attention_pool_multiimg_sig.1} parent=11 // pred_check_branch
          %173 = sbr.rel (%p171) target = $region20
        $region19: #{simple_attention_pool_multiimg_sig.1} parent=11 // pred_region
          _
        $region20: #{simple_attention_pool_multiimg_sig.1} parent=11 // pred_fallthru
          _
      $region12: #{simple_attention_pool_multiimg_sig.1} parent=5 // pred_fallthru
        _
      %p174 = scmp.lt.s32.totalorder %s15, 2
      // Predicated region
      $region21: #{simple_attention_pool_multiimg_sig.1} parent=5 // pred_check
        %p175 = pneg %p174
      $region22: #{simple_attention_pool_multiimg_sig.1} parent=5 // pred_check_branch
        %177 = sbr.rel (%p175) target = $region24
      $region23: #{simple_attention_pool_multiimg_sig.1} parent=5 // pred_region
        // Predicated region
        $region25: #{simple_attention_pool_multiimg_sig.1} parent=23 // pred_check
          %p178 = pneg %p49
        $region26: #{simple_attention_pool_multiimg_sig.1} parent=23 // pred_check_branch
          %180 = sbr.rel (%p178) target = $region28
        $region27: #{simple_attention_pool_multiimg_sig.1} parent=23 // pred_region
          %p181 = scmp.lt.s32.totalorder %s22, 1
          %s182 = scalar_select %p181, %s22, 1
          %p183 = scmp.lt.s32.totalorder %s23, 0
          %s184 = scalar_select %p183, %s23, 0
          %s185 = smul.addr %s184, 2
          %s186 = smul.addr %s182, 16
          %s187 = sadd.s32 %s185, %s186
          %s188 = smul.addr %s187, 4
          %s189 = scalar_lea.vmem %s0, %s188
        $region28: #{simple_attention_pool_multiimg_sig.1} parent=23 // pred_fallthru
          _
      $region24: #{simple_attention_pool_multiimg_sig.1} parent=5 // pred_fallthru
        _
      %p190 = scmp.le.s32.totalorder 1, %s15
      %p191 = scmp.lt.s32.totalorder %s15, 3
      %p192 = pnand %p190, %p191
      %p193 = pneg %p192
      // Predicated region
      $region29: #{simple_attention_pool_multiimg_sig.1} parent=5 // pred_check
        _
      $region30: #{simple_attention_pool_multiimg_sig.1} parent=5 // pred_check_branch
        %195 = sbr.rel (%p192) target = $region32
      $region31: #{simple_attention_pool_multiimg_sig.1} parent=5 // pred_region
        %s196 = ssub.s32 %s15, 1
        %p197 = scmp.lt.s32.totalorder %s24, 1
        %s198 = scalar_select %p197, %s24, 1
        %p199 = scmp.lt.s32.totalorder %s25, 0
        %s200 = scalar_select %p199, %s25, 0
        %s201 = smul.addr %s200, 2
        %s202 = smul.addr %s198, 16
        %s203 = sadd.s32 %s201, %s202
        %s204 = smul.addr %s203, 4
        %s205 = scalar_lea.vmem %s0, %s204
        %p206 = pneg %p55
        %p207 = pneg %p52
        %p208 = pneg %p76
        %p209 = pneg %p73
        %p210 = pneg %p97
        %p211 = pneg %p94
        %p212 = pneg %p125
        %p213 = pneg %p122
        %s214 = sand.u32 %s112, 1
        %s215 = scalar_lea.sflag [#allocation4], %s214
        %s216 = sand.u32 %s112, 1
        %s217 = smul.addr %s216, 8
        %s218 = scalar_lea.vmem [#allocation3], %s217
        %p219 = pneg %p153
        %p220 = pneg %p150
        %p221 = scmp.lt.s32.totalorder %s24, 1
        %s222 = scalar_select %p221, %s24, 1
        %p223 = scmp.lt.s32.totalorder %s25, 0
        %s224 = scalar_select %p223, %s25, 0
        %s225 = sadd.s32 %s224, %s222
        %s226 = smul.addr %s225, 4
        %s227 = scalar_lea.vmem %s4, %s226
        %p228 = scmp.lt.s32.totalorder %s24, 1
        %s229 = scalar_select %p228, %s24, 1
        %p230 = scmp.lt.s32.totalorder %s25, 0
        %s231 = scalar_select %p230, %s25, 0
        %s232 = smul.addr %s231, 2
        %s233 = smul.addr %s229, 16
        %s234 = sadd.s32 %s232, %s233
        %s235 = smul.addr %s234, 4
        %s236 = scalar_lea.vmem %s0, %s235
        %p237 = scmp.lt.s32.totalorder %s24, 1
        %s238 = scalar_select %p237, %s24, 1
        %p239 = scmp.lt.s32.totalorder %s25, 0
        %s240 = scalar_select %p239, %s25, 0
        %s241 = sadd.s32 %s240, %s238
        %s242 = smul.addr %s241, 4
        %s243 = scalar_lea.vmem %s4, %s242
        %v244 = vld [vmem:[%s236] sm:$0xff]
        %v245 = vld [vmem:[%s236 + $0x8] sm:$0xff]
        %v246 = vld [vmem:[%s236 + $0x10] sm:$0xff]
        %v247 = vld [vmem:[%s236 + $0x18] sm:$0xff]
        %v248 = vld [vmem:[%s236 + $0x20] sm:$0xff]
        %v249 = vld [vmem:[%s236 + $0x28] sm:$0xff]
        %v250 = vld [vmem:[%s236 + $0x30] sm:$0xff]
        %v251 = vld [vmem:[%s236 + $0x38] sm:$0xff]
        %v252 = vld [vmem:[%s1] sm:$0x1]
        %v253 = vld [vmem:[%s1 + $0x1] sm:$0x1]
        %v254 = vld [vmem:[%s1 + $0x2] sm:$0x1]
        %v255 = vld [vmem:[%s1 + $0x3] sm:$0x1]
        %v256 = vld [vmem:[%s1 + $0x4] sm:$0x1]
        %v257 = vld [vmem:[%s1 + $0x5] sm:$0x1]
        %v258 = vld [vmem:[%s1 + $0x6] sm:$0x1]
        %v259 = vld [vmem:[%s1 + $0x7] sm:$0x1]
        %s260 = sld [smem:[#allocation2]]
        %v269 = vlaneseq
        %v270 = vshrl.u32 %v269, 7
        %v271 = vsub.s32 0, %v270
        %v272 = vrot.slane %v252, %v271
        %v273 = vlaneseq
        %v274 = vshrl.u32 %v273, 7
        %v275 = vsub.s32 0, %v274
        %v276 = vrot.slane %v253, %v275
        %v277 = vlaneseq
        %v278 = vshrl.u32 %v277, 7
        %v279 = vsub.s32 0, %v278
        %v280 = vrot.slane %v254, %v279
        %v281 = vlaneseq
        %v282 = vshrl.u32 %v281, 7
        %v283 = vsub.s32 0, %v282
        %v284 = vrot.slane %v255, %v283
        %v285 = vlaneseq
        %v286 = vshrl.u32 %v285, 7
        %v287 = vsub.s32 0, %v286
        %v288 = vrot.slane %v256, %v287
        %v289 = vlaneseq
        %v290 = vshrl.u32 %v289, 7
        %v291 = vsub.s32 0, %v290
        %v292 = vrot.slane %v257, %v291
        %v293 = vlaneseq
        %v294 = vshrl.u32 %v293, 7
        %v295 = vsub.s32 0, %v294
        %v296 = vrot.slane %v258, %v295
        %v297 = vlaneseq
        %v298 = vshrl.u32 %v297, 7
        %v299 = vsub.s32 0, %v298
        %v300 = vrot.slane %v259, %v299
        %301 = vset.pattern.permute.xlu0 0
        %302 = vperm.xlu0 %301, %v272
        %v303 = vpop.permute.xlu0 %302
        %305 = vset.pattern.permute.xlu0 0
        %306 = vperm.xlu0 %305, %v276
        %v307 = vpop.permute.xlu0 %306
        %309 = vset.pattern.permute.xlu0 0
        %310 = vperm.xlu0 %309, %v280
        %v311 = vpop.permute.xlu0 %310
        %313 = vset.pattern.permute.xlu0 0
        %314 = vperm.xlu0 %313, %v284
        %v315 = vpop.permute.xlu0 %314
        %317 = vset.pattern.permute.xlu0 0
        %318 = vperm.xlu0 %317, %v288
        %v319 = vpop.permute.xlu0 %318
        %321 = vset.pattern.permute.xlu0 0
        %322 = vperm.xlu0 %321, %v292
        %v323 = vpop.permute.xlu0 %322
        %325 = vset.pattern.permute.xlu0 0
        %326 = vperm.xlu0 %325, %v296
        %v327 = vpop.permute.xlu0 %326
        %329 = vset.pattern.permute.xlu0 0
        %330 = vperm.xlu0 %329, %v300
        %v331 = vpop.permute.xlu0 %330
        %v333 = vmul.f32 %v244, %v303
        %v334 = vmul.f32 %v245, %v307
        %v335 = vmul.f32 %v246, %v311
        %v336 = vmul.f32 %v247, %v315
        %v337 = vmul.f32 %v248, %v319
        %v338 = vmul.f32 %v249, %v323
        %v339 = vmul.f32 %v250, %v327
        %v340 = vmul.f32 %v251, %v331
        %v349 = vcombine.high %v333, %v333
        %v350 = vcombine.high %v334, %v334
        %v351 = vcombine.high %v335, %v335
        %v352 = vcombine.high %v336, %v336
        %v353 = vcombine.high %v337, %v337
        %v354 = vcombine.high %v338, %v338
        %v355 = vcombine.high %v339, %v339
        %v356 = vcombine.high %v340, %v340
        %vm365 = vcmask 1043456
        %v366 = vsel %vm365, %v333, 0.0
        %v367 = vsel %vm365, %v334, 0.0
        %v368 = vadd.f32 %v366, %v367
        %v369 = vsel %vm365, %v335, 0.0
        %v370 = vadd.f32 %v368, %v369
        %v371 = vsel %vm365, %v336, 0.0
        %v372 = vadd.f32 %v370, %v371
        %v373 = vsel %vm365, %v337, 0.0
        %v374 = vadd.f32 %v372, %v373
        %v375 = vsel %vm365, %v338, 0.0
        %v376 = vadd.f32 %v374, %v375
        %v377 = vsel %vm365, %v339, 0.0
        %v378 = vadd.f32 %v376, %v377
        %v379 = vsel %vm365, %v340, 0.0
        %v380 = vadd.f32 %v378, %v379
        %v381 = vsel %vm365, %v349, 0.0
        %v382 = vsel %vm365, %v350, 0.0
        %v383 = vadd.f32 %v381, %v382
        %v384 = vsel %vm365, %v351, 0.0
        %v385 = vadd.f32 %v383, %v384
        %v386 = vsel %vm365, %v352, 0.0
        %v387 = vadd.f32 %v385, %v386
        %v388 = vsel %vm365, %v353, 0.0
        %v389 = vadd.f32 %v387, %v388
        %v390 = vsel %vm365, %v354, 0.0
        %v391 = vadd.f32 %v389, %v390
        %v392 = vsel %vm365, %v355, 0.0
        %v393 = vadd.f32 %v391, %v392
        %v394 = vsel %vm365, %v356, 0.0
        %v395 = vadd.f32 %v393, %v394
        %v396 = vstv %s260
        %v397 = vadd.f32 %v380, %v396
        %v398 = vadd.f32 %v395, %v396
        %v399 = vxor.u32 %v397, 2147483648
        %v400 = vxor.u32 %v398, 2147483648
        %v401 = vmul.f32 %v399, 1.442695
        %v402 = vpow.pop %v401
        %v403 = vmul.f32 %v400, 1.442695
        %v404 = vpow.pop %v403
        %v405 = vadd.f32 %v402, 1.0
        %v406 = vadd.f32 %v404, 1.0
        %v407 = vrcp.pop %v405
        %v408 = vmul.f32 1.0, %v407
        %v409 = vrcp.pop %v406
        %v410 = vmul.f32 1.0, %v409
        %v413 = vcombine.low %v408, %v410
        %v415 = vmul.f32 %v244, %v413
        %v416 = vmul.f32 %v245, %v413
        %v417 = vmul.f32 %v246, %v413
        %v418 = vmul.f32 %v247, %v413
        %v419 = vmul.f32 %v248, %v413
        %v420 = vmul.f32 %v249, %v413
        %v421 = vmul.f32 %v250, %v413
        %v422 = vmul.f32 %v251, %v413
        %v431 = vcombine.high %v415, %v415
        %v432 = vcombine.high %v416, %v416
        %v433 = vcombine.high %v417, %v417
        %v434 = vcombine.high %v418, %v418
        %v435 = vcombine.high %v419, %v419
        %v436 = vcombine.high %v420, %v420
        %v437 = vcombine.high %v421, %v421
        %v438 = vcombine.high %v422, %v422
        %v447 = vsel %vm365, %v415, 0.0
        %v448 = vsel %vm365, %v431, 0.0
        %v449 = vadd.f32 %v447, %v448
        %450 = vadd.xlane.f32.xlu0 %v449
        %v451 = vpop.xlane.xlu0 %450
        %v452 = vsel %vm365, %v416, 0.0
        %v453 = vsel %vm365, %v432, 0.0
        %v454 = vadd.f32 %v452, %v453
        %455 = vadd.xlane.f32.xlu0 %v454
        %v456 = vpop.xlane.xlu0 %455
        %v457 = vsel %vm365, %v417, 0.0
        %v458 = vsel %vm365, %v433, 0.0
        %v459 = vadd.f32 %v457, %v458
        %460 = vadd.xlane.f32.xlu0 %v459
        %v461 = vpop.xlane.xlu0 %460
        %v462 = vsel %vm365, %v418, 0.0
        %v463 = vsel %vm365, %v434, 0.0
        %v464 = vadd.f32 %v462, %v463
        %465 = vadd.xlane.f32.xlu0 %v464
        %v466 = vpop.xlane.xlu0 %465
        %v467 = vsel %vm365, %v419, 0.0
        %v468 = vsel %vm365, %v435, 0.0
        %v469 = vadd.f32 %v467, %v468
        %470 = vadd.xlane.f32.xlu0 %v469
        %v471 = vpop.xlane.xlu0 %470
        %v472 = vsel %vm365, %v420, 0.0
        %v473 = vsel %vm365, %v436, 0.0
        %v474 = vadd.f32 %v472, %v473
        %475 = vadd.xlane.f32.xlu0 %v474
        %v476 = vpop.xlane.xlu0 %475
        %v477 = vsel %vm365, %v421, 0.0
        %v478 = vsel %vm365, %v437, 0.0
        %v479 = vadd.f32 %v477, %v478
        %480 = vadd.xlane.f32.xlu0 %v479
        %v481 = vpop.xlane.xlu0 %480
        %v482 = vsel %vm365, %v422, 0.0
        %v483 = vsel %vm365, %v438, 0.0
        %v484 = vadd.f32 %v482, %v483
        %485 = vadd.xlane.f32.xlu0 %v484
        %v486 = vpop.xlane.xlu0 %485
        %v489 = vcombine.low %v397, %v398
        %491 = vst [vmem:[%s218] sm:$0xff] %v489
        %v500 = vlaneseq
        %v501 = vand.u32 %v500, 127
        %v502 = vlaneseq
        %v503 = vshrl.u32 %v502, 7
        %v504 = vsub.s32 %v501, %v503
        %v505 = vrot.slane %v451, %v504
        %v506 = vlaneseq
        %v507 = vshrl.u32 %v506, 7
        %v508 = vsub.s32 %v501, %v507
        %v509 = vrot.slane %v456, %v508
        %v510 = vlaneseq
        %v511 = vshrl.u32 %v510, 7
        %v512 = vsub.s32 %v501, %v511
        %v513 = vrot.slane %v461, %v512
        %v514 = vlaneseq
        %v515 = vshrl.u32 %v514, 7
        %v516 = vsub.s32 %v501, %v515
        %v517 = vrot.slane %v466, %v516
        %v518 = vlaneseq
        %v519 = vshrl.u32 %v518, 7
        %v520 = vsub.s32 %v501, %v519
        %v521 = vrot.slane %v471, %v520
        %v522 = vlaneseq
        %v523 = vshrl.u32 %v522, 7
        %v524 = vsub.s32 %v501, %v523
        %v525 = vrot.slane %v476, %v524
        %v526 = vlaneseq
        %v527 = vshrl.u32 %v526, 7
        %v528 = vsub.s32 %v501, %v527
        %v529 = vrot.slane %v481, %v528
        %v530 = vlaneseq
        %v531 = vshrl.u32 %v530, 7
        %v532 = vsub.s32 %v501, %v531
        %v533 = vrot.slane %v486, %v532
        %vm534 = vcmask 1041409
        %v535 = vsel %vm534, %v509, %v505
        %vm536 = vcmask 1042434
        %v537 = vsel %vm536, %v513, %v535
        %vm538 = vcmask 1043459
        %v539 = vsel %vm538, %v517, %v537
        %vm540 = vcmask 1044484
        %v541 = vsel %vm540, %v521, %v539
        %vm542 = vcmask 1045509
        %v543 = vsel %vm542, %v525, %v541
        %vm544 = vcmask 1046534
        %v545 = vsel %vm544, %v529, %v543
        %vm546 = vcmask 1047559
        %v547 = vsel %vm546, %v533, %v545
        %549 = vxpose.xlu0.b32.start [1/16] %v547, 128
        %550 = vxpose.xlu0.b32.cont [2/16] 0.0, 128
        %551 = vxpose.xlu0.b32.cont [3/16] 0.0, 128
        %552 = vxpose.xlu0.b32.cont [4/16] 0.0, 128
        %553 = vxpose.xlu0.b32.cont [5/16] 0.0, 128
        %554 = vxpose.xlu0.b32.cont [6/16] 0.0, 128
        %555 = vxpose.xlu0.b32.cont [7/16] 0.0, 128
        %556 = vxpose.xlu0.b32.cont [8/16] 0.0, 128
        %557 = vxpose.xlu0.b32.cont [9/16] 0.0, 128
        %558 = vxpose.xlu0.b32.cont [10/16] 0.0, 128
        %559 = vxpose.xlu0.b32.cont [11/16] 0.0, 128
        %560 = vxpose.xlu0.b32.cont [12/16] 0.0, 128
        %561 = vxpose.xlu0.b32.cont [13/16] 0.0, 128
        %562 = vxpose.xlu0.b32.cont [14/16] 0.0, 128
        %563 = vxpose.xlu0.b32.cont [15/16] 0.0, 128
        %564 = vxpose.xlu0.b32.end [16/16] 0.0, 128
        %v565 = vpop.trf.xlu0
        %v566 = vpop.trf.xlu0
        %v567 = vpop.trf.xlu0
        %v568 = vpop.trf.xlu0
        %v569 = vpop.trf.xlu0
        %v570 = vpop.trf.xlu0
        %v571 = vpop.trf.xlu0
        %v572 = vpop.trf.xlu0
        %v573 = vpop.trf.xlu0
        %v574 = vpop.trf.xlu0
        %v575 = vpop.trf.xlu0
        %v576 = vpop.trf.xlu0
        %v577 = vpop.trf.xlu0
        %v578 = vpop.trf.xlu0
        %v579 = vpop.trf.xlu0
        %v580 = vpop.trf.xlu0
        %vm581 = vcmask 60416
        %582 = vst.msk [vmem:[%s243] sm:$0xf] %vm581, %v565
        %s583 = sand.u32 %s112, 1
        %s584 = scalar_lea.sflag [#allocation4], %s583
        %s585 = sand.u32 %s112, 1
        %s586 = smul.addr %s585, 8
        %s587 = scalar_lea.vmem [#allocation3], %s586
        %p588 = scmp.lt.s32.totalorder %s24, 1
        %s589 = scalar_select %p588, %s24, 1
        %p590 = scmp.lt.s32.totalorder %s25, 0
        %s591 = scalar_select %p590, %s25, 0
        %s592 = sadd.s32 %s591, %s589
        %s593 = smul.addr %s592, 4
        %s594 = scalar_lea.vmem %s4, %s593
        // Predicated region
        $region33: #{simple_attention_pool_multiimg_sig.1} parent=31 // pred_check
          %p595 = pneg %p122
        $region34: #{simple_attention_pool_multiimg_sig.1} parent=31 // pred_check_branch
          %597 = sbr.rel (%p595) target = $region36
        $region35: #{simple_attention_pool_multiimg_sig.1} parent=31 // pred_region
          %s599 = ssub.s32 128, 128
          %600 = vsyncadd %s584, %s599
          %s601 = smul.addr %s25, 2
          %s602 = smul.addr %s24, 2
          %s603 = sadd.s32 %s601, %s602
          %s604 = smul.addr %s603, 64
          %s605 = scalar_lea.hbm %s3, %s604
          %s607 = sshll.u32 %s587, 4
          %s608 = int_to_ptr.vmem [resolvable:$true] %s607
          %610 = dma.vmem_to_hbm [thread:$0]  %s608, 128, %s605, %s584
        $region36: #{simple_attention_pool_multiimg_sig.1} parent=31 // pred_fallthru
          _
        // Predicated region
        $region37: #{simple_attention_pool_multiimg_sig.1} parent=31 // pred_check
          %p611 = pneg %p150
        $region38: #{simple_attention_pool_multiimg_sig.1} parent=31 // pred_check_branch
          %613 = sbr.rel (%p611) target = $region40
        $region39: #{simple_attention_pool_multiimg_sig.1} parent=31 // pred_region
          _
        $region40: #{simple_attention_pool_multiimg_sig.1} parent=31 // pred_fallthru
          _
      $region32: #{simple_attention_pool_multiimg_sig.1} parent=5 // pred_fallthru
        _
      %p614 = scmp.le.s32.totalorder 2, %s15
      // Predicated region
      $region41: #{simple_attention_pool_multiimg_sig.1} parent=5 // pred_check
        %p615 = pneg %p614
      $region42: #{simple_attention_pool_multiimg_sig.1} parent=5 // pred_check_branch
        %617 = sbr.rel (%p615) target = $region44
      $region43: #{simple_attention_pool_multiimg_sig.1} parent=5 // pred_region
        %s618 = ssub.s32 %s15, 2
        // Predicated region
        $region45: #{simple_attention_pool_multiimg_sig.1} parent=43 // pred_check
          %p619 = pneg %p128
        $region46: #{simple_attention_pool_multiimg_sig.1} parent=43 // pred_check_branch
          %621 = sbr.rel (%p619) target = $region48
        $region47: #{simple_attention_pool_multiimg_sig.1} parent=43 // pred_region
          %s622 = sand.u32 %s113, 1
          %s623 = scalar_lea.sflag [#allocation4], %s622
          %s624 = sand.u32 %s113, 1
          %s625 = smul.addr %s624, 8
          %s626 = scalar_lea.vmem [#allocation3], %s625
          %627 = dma.done %s623, 128
        $region48: #{simple_attention_pool_multiimg_sig.1} parent=43 // pred_fallthru
          _
        // Predicated region
        $region49: #{simple_attention_pool_multiimg_sig.1} parent=43 // pred_check
          %p628 = pneg %p156
        $region50: #{simple_attention_pool_multiimg_sig.1} parent=43 // pred_check_branch
          %630 = sbr.rel (%p628) target = $region52
        $region51: #{simple_attention_pool_multiimg_sig.1} parent=43 // pred_region
          %p631 = scmp.lt.s32.totalorder %s26, 1
          %s632 = scalar_select %p631, %s26, 1
          %p633 = scmp.lt.s32.totalorder %s27, 0
          %s634 = scalar_select %p633, %s27, 0
          %s635 = sadd.s32 %s634, %s632
          %s636 = smul.addr %s635, 4
          %s637 = scalar_lea.vmem %s4, %s636
        $region52: #{simple_attention_pool_multiimg_sig.1} parent=43 // pred_fallthru
          _
      $region44: #{simple_attention_pool_multiimg_sig.1} parent=5 // pred_fallthru
        _
    $region6: #{simple_attention_pool_multiimg_sig.1} parent=1 // loop_footer
      %s19 = sadd.s32 1, %s15
    $region7: #{simple_attention_pool_multiimg_sig.1} parent=1 // loop_footer_branch
      %14 = sbr.rel target = $region3
    $region8: #{simple_attention_pool_multiimg_sig.1} parent=1 // loop_exit
      _
    %638 = vsyncpa [#allocation4], 1
    %s639 = scalar_lea.sflag [#allocation4], 1
    %640 = vsyncpa %s639, 1

</llo_original>
